<compile_context>
chip_gen: v7x
topology: tpu7x:2x2x1
jax: 0.10.0
libtpu: 0.0.40
codegen_flags: <defaults>
</compile_context>

<pallas_src>
import functools

import jax
import jax.numpy as jnp
from jax.experimental import pallas as pl
from jax.experimental.pallas import tpu as pltpu

IN_DIM = 103
HID_DIM = 103
OUT_DIM = 14

# Lane-aligned (padded) feature dims.
IN_PAD = 128
HID_PAD = 128


def _round_up(n, m):
    return ((n + m - 1) // m) * m


def _mlp_kernel(x_ref, w1_ref, b1_ref, w2_ref, b2_ref, o_ref):
    # fc1 on the MXU: bf16 operands, f32 accumulation.
    h = jnp.dot(x_ref[...], w1_ref[...], preferred_element_type=jnp.float32)
    h = jnp.maximum(h + b1_ref[...], 0.0)          # bias + ReLU in f32 (VPU)
    # fc2 on the MXU: bf16 operands, f32 accumulation.
    y = jnp.dot(h.astype(jnp.bfloat16), w2_ref[...],
                preferred_element_type=jnp.float32)
    o_ref[...] = (y + b2_ref[...]).astype(o_ref.dtype)


@functools.partial(jax.jit, static_argnames=("block_b",))
def nnet_forward(x, w1, b1, w2, b2, *, block_b=512):
    """x: (B, 103) f32; w1: (103, 103); b1: (103,); w2: (103, 14); b2: (14,).

    Weights are stored as (in_features, out_features) — transposed relative to
    PyTorch nn.Linear — so the kernel computes y = relu(x @ W1 + b1) @ W2 + b2.
    Returns (B, 14) float32.
    """
    B = x.shape[0]

    # Tile size: multiple of 16 (bf16 sublane packing), capped by block_b.
    tb = min(block_b, _round_up(B, 16))
    b_pad = _round_up(B, tb)
    grid = (b_pad // tb,)

    # --- Pad & cast operands (zero padding preserves the math). ---
    x_p = jnp.zeros((b_pad, IN_PAD), jnp.bfloat16)
    x_p = x_p.at[:B, :IN_DIM].set(x.astype(jnp.bfloat16))

    w1_p = jnp.zeros((IN_PAD, HID_PAD), jnp.bfloat16)
    w1_p = w1_p.at[:IN_DIM, :HID_DIM].set(w1.astype(jnp.bfloat16))
    b1_p = jnp.zeros((1, HID_PAD), jnp.float32)
    b1_p = b1_p.at[0, :HID_DIM].set(b1)

    w2_p = jnp.zeros((HID_PAD, OUT_DIM), jnp.bfloat16)
    w2_p = w2_p.at[:HID_DIM, :].set(w2.astype(jnp.bfloat16))
    b2_p = b2.reshape(1, OUT_DIM).astype(jnp.float32)

    out = pl.pallas_call(
        _mlp_kernel,
        out_shape=jax.ShapeDtypeStruct((b_pad, OUT_DIM), jnp.float32),
        grid=grid,
        in_specs=[
            pl.BlockSpec((tb, IN_PAD), lambda i: (i, 0)),       # x: batch-tiled
            pl.BlockSpec((IN_PAD, HID_PAD), lambda i: (0, 0)),  # W1: resident
            pl.BlockSpec((1, HID_PAD), lambda i: (0, 0)),       # b1: resident
            pl.BlockSpec((HID_PAD, OUT_DIM), lambda i: (0, 0)), # W2: resident
            pl.BlockSpec((1, OUT_DIM), lambda i: (0, 0)),       # b2: resident
        ],
        out_specs=pl.BlockSpec((tb, OUT_DIM), lambda i: (i, 0)),
        compiler_params=pltpu.CompilerParams(
            dimension_semantics=("parallel",),
        ),
    )(x_p, w1_p, b1_p, w2_p, b2_p)

    return out[:B]


def init_params(key):
    """Deterministic init mimicking nn.Linear's U(-1/sqrt(fan_in), 1/sqrt(fan_in))."""
    k1, k2, k3, k4 = jax.random.split(key, 4)
    lim1 = 1.0 / jnp.sqrt(jnp.float32(IN_DIM))
    lim2 = 1.0 / jnp.sqrt(jnp.float32(HID_DIM))
    w1 = jax.random.uniform(k1, (IN_DIM, HID_DIM), jnp.float32, -lim1, lim1)
    b1 = jax.random.uniform(k2, (HID_DIM,), jnp.float32, -lim1, lim1)
    w2 = jax.random.uniform(k3, (HID_DIM, OUT_DIM), jnp.float32, -lim2, lim2)
    b2 = jax.random.uniform(k4, (OUT_DIM,), jnp.float32, -lim2, lim2)
    return w1, b1, w2, b2


if __name__ == "__main__":
    key = jax.random.PRNGKey(0)
    kx, kp = jax.random.split(key)
    batch = 8
    x = jax.random.normal(kx, (batch, IN_DIM), jnp.float32)
    w1, b1, w2, b2 = init_params(kp)

    out = nnet_forward(x, w1, b1, w2, b2)
    jax.block_until_ready(out)
    assert out.shape == (batch, OUT_DIM)

    # Reference 1: same bf16-operand / f32-accumulate math in plain JAX (tight).
    xb, w1b, w2b = (a.astype(jnp.bfloat16) for a in (x, w1, w2))
    h_ref = jnp.maximum(
        jnp.dot(xb, w1b, preferred_element_type=jnp.float32) + b1, 0.0)
    ref_bf16 = jnp.dot(h_ref.astype(jnp.bfloat16), w2b,
                       preferred_element_type=jnp.float32) + b2
    assert jnp.allclose(out, ref_bf16, atol=1e-3, rtol=1e-3), (
        jnp.max(jnp.abs(out - ref_bf16)))

    # Reference 2: full f32 math (loose tolerance for bf16 MXU operands).
    ref_f32 = jnp.maximum(x @ w1 + b1, 0.0) @ w2 + b2
    assert jnp.allclose(out, ref_f32, atol=5e-2, rtol=5e-2), (
        jnp.max(jnp.abs(out - ref_f32)))

    print("KERNEL_OK")
</pallas_src>

<mosaic_0001>
module attributes {stable_mosaic.version = 11 : i64} {
  func.func @_mlp_kernel(%arg0: i32, %arg1: memref<16x128xbf16, #tpu.memory_space<vmem>>, %arg2: memref<128x128xbf16, #tpu.memory_space<vmem>>, %arg3: memref<1x128xf32, #tpu.memory_space<vmem>>, %arg4: memref<128x14xbf16, #tpu.memory_space<vmem>>, %arg5: memref<1x14xf32, #tpu.memory_space<vmem>>, %arg6: memref<16x14xf32, #tpu.memory_space<vmem>>) attributes {dimension_semantics = [#tpu.dimension_semantics<parallel>], iteration_bounds = array<i64: 1>, scalar_prefetch = 0 : i64, scratch_operands = 0 : i64, tpu.core_type = #tpu.core_type<tc>, window_params = [{transform_indices = @transform_0, window_bounds = array<i64: 16, 128>}, {pipeline_mode = #tpu.pipeline_mode<synchronous>, transform_indices = @transform_1, window_bounds = array<i64: 128, 128>}, {pipeline_mode = #tpu.pipeline_mode<synchronous>, transform_indices = @transform_2, window_bounds = array<i64: 1, 128>}, {pipeline_mode = #tpu.pipeline_mode<synchronous>, transform_indices = @transform_3, window_bounds = array<i64: 128, 14>}, {pipeline_mode = #tpu.pipeline_mode<synchronous>, transform_indices = @transform_4, window_bounds = array<i64: 1, 14>}, {transform_indices = @transform_5, window_bounds = array<i64: 16, 14>}]} {
    %c0 = arith.constant 0 : index
    %c0_0 = arith.constant 0 : index
    %0 = vector.load %arg1[%c0, %c0_0] : memref<16x128xbf16, #tpu.memory_space<vmem>>, vector<16x128xbf16>
    %c0_1 = arith.constant 0 : index
    %c0_2 = arith.constant 0 : index
    %1 = vector.load %arg2[%c0_1, %c0_2] : memref<128x128xbf16, #tpu.memory_space<vmem>>, vector<128x128xbf16>
    %cst = arith.constant dense<0.000000e+00> : vector<16x128xf32>
    %2 = tpu.matmul %0, %1, %cst {dimension_numbers = #tpu.dot_dimension_numbers<[1], [0], [0], [1], [0, 0, 1, 1], [], []>} : vector<16x128xbf16>, vector<128x128xbf16>, vector<16x128xf32> -> vector<16x128xf32>
    %c0_3 = arith.constant 0 : index
    %c0_4 = arith.constant 0 : index
    %3 = vector.load %arg3[%c0_3, %c0_4] : memref<1x128xf32, #tpu.memory_space<vmem>>, vector<1x128xf32>
    %4 = vector.broadcast %3 : vector<1x128xf32> to vector<16x128xf32>
    %5 = arith.addf %2, %4 : vector<16x128xf32>
    %cst_5 = arith.constant 0.000000e+00 : f32
    %6 = vector.broadcast %cst_5 : f32 to vector<16x128xf32>
    %7 = arith.maximumf %5, %6 : vector<16x128xf32>
    %8 = arith.truncf %7 : vector<16x128xf32> to vector<16x128xbf16>
    %c0_6 = arith.constant 0 : index
    %c0_7 = arith.constant 0 : index
    %9 = vector.load %arg4[%c0_6, %c0_7] : memref<128x14xbf16, #tpu.memory_space<vmem>>, vector<128x14xbf16>
    %cst_8 = arith.constant dense<0.000000e+00> : vector<16x14xf32>
    %10 = tpu.matmul %8, %9, %cst_8 {dimension_numbers = #tpu.dot_dimension_numbers<[1], [0], [0], [1], [0, 0, 1, 1], [], []>} : vector<16x128xbf16>, vector<128x14xbf16>, vector<16x14xf32> -> vector<16x14xf32>
    %c0_9 = arith.constant 0 : index
    %c0_10 = arith.constant 0 : index
    %11 = vector.load %arg5[%c0_9, %c0_10] : memref<1x14xf32, #tpu.memory_space<vmem>>, vector<1x14xf32>
    %12 = vector.broadcast %11 : vector<1x14xf32> to vector<16x14xf32>
    %13 = arith.addf %10, %12 : vector<16x14xf32>
    %c0_11 = arith.constant 0 : index
    %c0_12 = arith.constant 0 : index
    %14 = vector.load %arg6[%c0_11, %c0_12] : memref<16x14xf32, #tpu.memory_space<vmem>>, vector<16x14xf32>
    tpu.vector_store %arg6[%c0_11, %c0_12], %13 {strides = array<i32>} : memref<16x14xf32, #tpu.memory_space<vmem>>, vector<16x14xf32>,
    return
  }
  func.func @transform_0(%arg0: i32) -> (i32, i32) {
    %c0_i32 = arith.constant 0 : i32
    %c0_i32_0 = arith.constant 0 : i32
    return %arg0, %c0_i32 : i32, i32
  }
  func.func @transform_1(%arg0: i32) -> (i32, i32) {
    %c0_i32 = arith.constant 0 : i32
    %c0_i32_0 = arith.constant 0 : i32
    %c0_i32_1 = arith.constant 0 : i32
    return %c0_i32, %c0_i32_0 : i32, i32
  }
  func.func @transform_2(%arg0: i32) -> (i32, i32) {
    %c0_i32 = arith.constant 0 : i32
    %c0_i32_0 = arith.constant 0 : i32
    %c0_i32_1 = arith.constant 0 : i32
    return %c0_i32, %c0_i32_0 : i32, i32
  }
  func.func @transform_3(%arg0: i32) -> (i32, i32) {
    %c0_i32 = arith.constant 0 : i32
    %c0_i32_0 = arith.constant 0 : i32
    %c0_i32_1 = arith.constant 0 : i32
    return %c0_i32, %c0_i32_0 : i32, i32
  }
  func.func @transform_4(%arg0: i32) -> (i32, i32) {
    %c0_i32 = arith.constant 0 : i32
    %c0_i32_0 = arith.constant 0 : i32
    %c0_i32_1 = arith.constant 0 : i32
    return %c0_i32, %c0_i32_0 : i32, i32
  }
  func.func @transform_5(%arg0: i32) -> (i32, i32) {
    %c0_i32 = arith.constant 0 : i32
    %c0_i32_0 = arith.constant 0 : i32
    return %arg0, %c0_i32 : i32, i32
  }
}

</mosaic_0001>

<llo_original>
// kernel: nnet_forward.1
$region0: #{nnet_forward.1}
  #allocation0 [shape = 'u32[]', space=smem, size = 0x4, offset = 0x4, fixed_abs, tag = 'smem constant byte address 0x4 - core index']
  #allocation1 [shape = 'u32[144,128]{1,0:T(1,128)}', space=vmem, size = 0x12000, scoped, tag = 'internal scratch']
  %s0 = inlined_call_operand.vmem [shape: bf16[16,128], index: 0, kind: input, shape index: {}]
  %s1 = inlined_call_operand.vmem [shape: bf16[128,128], index: 1, kind: input, shape index: {}]
  %s2 = inlined_call_operand.vmem [shape: f32[1,128], index: 2, kind: input, shape index: {}]
  %s3 = inlined_call_operand.vmem [shape: bf16[128,14], index: 3, kind: input, shape index: {}]
  %s4 = inlined_call_operand.vmem [shape: f32[1,14], index: 4, kind: input, shape index: {}]
  %s5 = inlined_call_operand.vmem [shape: f32[16,14], index: 5, kind: output, shape index: {}]
  %s6 = sld [smem:[#allocation0]]
  $region30: #{nnet_forward.1} parent=0
    _
  %s8 = ssub.s32 1, %s6
  %s9 = scalar_select 0, %s8, %s6
  // Predicated region
  $region2: #{nnet_forward.1} parent=0 // pred_check
    _
  $region3: #{nnet_forward.1} parent=0 // pred_check_branch
    %11 = sbr.rel (0) target = $region5
  $region4: #{nnet_forward.1} parent=0 // pred_region
    _
  $region5: #{nnet_forward.1} parent=0 // pred_fallthru
    _
  // Predicated region
  $region6: #{nnet_forward.1} parent=0 // pred_check
    _
  $region7: #{nnet_forward.1} parent=0 // pred_check_branch
    %13 = sbr.rel (0) target = $region9
  $region8: #{nnet_forward.1} parent=0 // pred_region
    _
  $region9: #{nnet_forward.1} parent=0 // pred_fallthru
    _
  // Predicated region
  $region10: #{nnet_forward.1} parent=0 // pred_check
    _
  $region11: #{nnet_forward.1} parent=0 // pred_check_branch
    %15 = sbr.rel (0) target = $region13
  $region12: #{nnet_forward.1} parent=0 // pred_region
    _
  $region13: #{nnet_forward.1} parent=0 // pred_fallthru
    _
  // Predicated region
  $region14: #{nnet_forward.1} parent=0 // pred_check
    _
  $region15: #{nnet_forward.1} parent=0 // pred_check_branch
    %17 = sbr.rel (0) target = $region17
  $region16: #{nnet_forward.1} parent=0 // pred_region
    _
  $region17: #{nnet_forward.1} parent=0 // pred_fallthru
    _
  // Predicated region
  $region18: #{nnet_forward.1} parent=0 // pred_check
    _
  $region19: #{nnet_forward.1} parent=0 // pred_check_branch
    %19 = sbr.rel (0) target = $region21
  $region20: #{nnet_forward.1} parent=0 // pred_region
    _
  $region21: #{nnet_forward.1} parent=0 // pred_fallthru
    _
  %v21 = vld [vmem:[%s0] sm:$0xf]
  %v22 = vld [vmem:[%s0 + $0x4] sm:$0xf]
  %v23 = vld [vmem:[%s1] sm:$0xf]
  %v24 = vld [vmem:[%s1 + $0x4] sm:$0xf]
  %v25 = vld [vmem:[%s1 + $0x8] sm:$0xf]
  %v26 = vld [vmem:[%s1 + $0xc] sm:$0xf]
  %v27 = vld [vmem:[%s1 + $0x10] sm:$0xf]
  %v28 = vld [vmem:[%s1 + $0x14] sm:$0xf]
  %v29 = vld [vmem:[%s1 + $0x18] sm:$0xf]
  %v30 = vld [vmem:[%s1 + $0x1c] sm:$0xf]
  %v31 = vld [vmem:[%s1 + $0x20] sm:$0xf]
  %v32 = vld [vmem:[%s1 + $0x24] sm:$0xf]
  %v33 = vld [vmem:[%s1 + $0x28] sm:$0xf]
  %v34 = vld [vmem:[%s1 + $0x2c] sm:$0xf]
  %v35 = vld [vmem:[%s1 + $0x30] sm:$0xf]
  %v36 = vld [vmem:[%s1 + $0x34] sm:$0xf]
  %v37 = vld [vmem:[%s1 + $0x38] sm:$0xf]
  %v38 = vld [vmem:[%s1 + $0x3c] sm:$0xf]
  %v39 = vld [vmem:[%s2] sm:$0x1]
  %v41 = vlaneseq
  %v42 = vshrl.u32 %v41, 7
  %v43 = vsub.s32 0, %v42
  %v44 = vrot.slane %v39, %v43
  %v48 = vunpack.c.l.b16 %v21
  %v49 = vunpack.c.l.b16 %v22
  %v50 = vpack.c.b16 %v49, %v48
  %v68 = vunpack.c.l.b16 %v23
  %v69 = vunpack.c.l.b16 %v24
  %v70 = vunpack.c.l.b16 %v25
  %v71 = vunpack.c.l.b16 %v26
  %v72 = vunpack.c.l.b16 %v27
  %v73 = vunpack.c.l.b16 %v28
  %v74 = vunpack.c.l.b16 %v29
  %v75 = vunpack.c.l.b16 %v30
  %v76 = vunpack.c.l.b16 %v31
  %v77 = vunpack.c.l.b16 %v32
  %v78 = vunpack.c.l.b16 %v33
  %v79 = vunpack.c.l.b16 %v34
  %v80 = vunpack.c.l.b16 %v35
  %v81 = vunpack.c.l.b16 %v36
  %v82 = vunpack.c.l.b16 %v37
  %v83 = vunpack.c.l.b16 %v38
  %v84 = vpack.c.b16 %v69, %v68
  %v85 = vpack.c.b16 %v71, %v70
  %v86 = vpack.c.b16 %v73, %v72
  %v87 = vpack.c.b16 %v75, %v74
  %v88 = vpack.c.b16 %v77, %v76
  %v89 = vpack.c.b16 %v79, %v78
  %v90 = vpack.c.b16 %v81, %v80
  %v91 = vpack.c.b16 %v83, %v82
  %100 = vmatprep.subr.bf16.mxu0 0
  %101 = vmatpush1.bf16.msra.mxu0 %v84
  %102 = vmatprep.subr.bf16.mxu0 0
  %103 = vmatpush1.bf16.msra.mxu0 %v85
  %104 = vmatprep.subr.bf16.mxu0 0
  %105 = vmatpush1.bf16.msra.mxu0 %v86
  %106 = vmatprep.subr.bf16.mxu0 0
  %107 = vmatpush1.bf16.msra.mxu0 %v87
  %108 = vmatprep.subr.bf16.mxu0 0
  %109 = vmatpush1.bf16.msra.mxu0 %v88
  %110 = vmatprep.subr.bf16.mxu0 0
  %111 = vmatpush1.bf16.msra.mxu0 %v89
  %112 = vmatprep.subr.bf16.mxu0 0
  %113 = vmatpush1.bf16.msra.mxu0 %v90
  %114 = vmatprep.subr.bf16.mxu0 0
  %115 = vmatpush1.bf16.msra.mxu0 %v91
  %116 = vmatprep.subr.bf16.mxu0 0
  %117 = vmatpush1.bf16.msra.mxu0 0
  %118 = vmatprep.subr.bf16.mxu0 0
  %119 = vmatpush1.bf16.msra.mxu0 0
  %120 = vmatprep.subr.bf16.mxu0 0
  %121 = vmatpush1.bf16.msra.mxu0 0
  %122 = vmatprep.subr.bf16.mxu0 0
  %123 = vmatpush1.bf16.msra.mxu0 0
  %124 = vmatprep.subr.bf16.mxu0 0
  %125 = vmatpush1.bf16.msra.mxu0 0
  %126 = vmatprep.subr.bf16.mxu0 0
  %127 = vmatpush1.bf16.msra.mxu0 0
  %128 = vmatprep.subr.bf16.mxu0 0
  %129 = vmatpush1.bf16.msra.mxu0 0
  %130 = vmatprep.subr.bf16.mxu0 0
  %131 = vmatpush1.bf16.msra.mxu0 0
  %132 = vmatprep.mubr.bf16.mxu0 0
  %133 = vmatmul.mubr.bf16.gmra.mrb[0].mxu0 %v50
  %v134 = vpop.f32.mrb[0].mxu0
  %v135 = vadd.f32 %v44, %v134
  %v136 = vpop.f32.mrb[0].mxu0
  %v137 = vpop.f32.mrb[0].mxu0
  %v138 = vadd.f32 %v44, %v137
  %v139 = vpop.f32.mrb[0].mxu0
  %140 = vdwg.mxu0
  %v141 = vmax.f32 %v135, 0.0
  %v142 = vmax.f32 %v138, 0.0
  %v143 = vpack.c.bf16 %v142, %v141
  %v144 = vld [vmem:[%s3] sm:$0xf]
  %v145 = vld [vmem:[%s3 + $0x4] sm:$0xf]
  %v146 = vld [vmem:[%s3 + $0x8] sm:$0xf]
  %v147 = vld [vmem:[%s3 + $0xc] sm:$0xf]
  %v148 = vld [vmem:[%s3 + $0x10] sm:$0xf]
  %v149 = vld [vmem:[%s3 + $0x14] sm:$0xf]
  %v150 = vld [vmem:[%s3 + $0x18] sm:$0xf]
  %v151 = vld [vmem:[%s3 + $0x1c] sm:$0xf]
  %v152 = vld [vmem:[%s3 + $0x20] sm:$0xf]
  %v153 = vld [vmem:[%s3 + $0x24] sm:$0xf]
  %v154 = vld [vmem:[%s3 + $0x28] sm:$0xf]
  %v155 = vld [vmem:[%s3 + $0x2c] sm:$0xf]
  %v156 = vld [vmem:[%s3 + $0x30] sm:$0xf]
  %v157 = vld [vmem:[%s3 + $0x34] sm:$0xf]
  %v158 = vld [vmem:[%s3 + $0x38] sm:$0xf]
  %v159 = vld [vmem:[%s3 + $0x3c] sm:$0xf]
  %v160 = vld [vmem:[%s4] sm:$0x1]
  %v162 = vlaneseq
  %v163 = vshrl.u32 %v162, 7
  %v164 = vsub.s32 0, %v163
  %v165 = vrot.slane %v160, %v164
  %v183 = vunpack.c.l.b16 %v144
  %v184 = vunpack.c.l.b16 %v145
  %v185 = vunpack.c.l.b16 %v146
  %v186 = vunpack.c.l.b16 %v147
  %v187 = vunpack.c.l.b16 %v148
  %v188 = vunpack.c.l.b16 %v149
  %v189 = vunpack.c.l.b16 %v150
  %v190 = vunpack.c.l.b16 %v151
  %v191 = vunpack.c.l.b16 %v152
  %v192 = vunpack.c.l.b16 %v153
  %v193 = vunpack.c.l.b16 %v154
  %v194 = vunpack.c.l.b16 %v155
  %v195 = vunpack.c.l.b16 %v156
  %v196 = vunpack.c.l.b16 %v157
  %v197 = vunpack.c.l.b16 %v158
  %v198 = vunpack.c.l.b16 %v159
  %v199 = vpack.c.b16 %v184, %v183
  %v200 = vpack.c.b16 %v186, %v185
  %v201 = vpack.c.b16 %v188, %v187
  %v202 = vpack.c.b16 %v190, %v189
  %v203 = vpack.c.b16 %v192, %v191
  %v204 = vpack.c.b16 %v194, %v193
  %v205 = vpack.c.b16 %v196, %v195
  %v206 = vpack.c.b16 %v198, %v197
  %215 = vmatprep.subr.bf16.mxu0 0
  %216 = vmatpush1.bf16.msra.mxu0 %v199
  %217 = vmatprep.subr.bf16.mxu0 0
  %218 = vmatpush1.bf16.msra.mxu0 %v200
  %219 = vmatprep.subr.bf16.mxu0 0
  %220 = vmatpush1.bf16.msra.mxu0 %v201
  %221 = vmatprep.subr.bf16.mxu0 0
  %222 = vmatpush1.bf16.msra.mxu0 %v202
  %223 = vmatprep.subr.bf16.mxu0 0
  %224 = vmatpush1.bf16.msra.mxu0 %v203
  %225 = vmatprep.subr.bf16.mxu0 0
  %226 = vmatpush1.bf16.msra.mxu0 %v204
  %227 = vmatprep.subr.bf16.mxu0 0
  %228 = vmatpush1.bf16.msra.mxu0 %v205
  %229 = vmatprep.subr.bf16.mxu0 0
  %230 = vmatpush1.bf16.msra.mxu0 %v206
  %231 = vmatprep.subr.bf16.mxu0 0
  %232 = vmatpush1.bf16.msra.mxu0 0
  %233 = vmatprep.subr.bf16.mxu0 0
  %234 = vmatpush1.bf16.msra.mxu0 0
  %235 = vmatprep.subr.bf16.mxu0 0
  %236 = vmatpush1.bf16.msra.mxu0 0
  %237 = vmatprep.subr.bf16.mxu0 0
  %238 = vmatpush1.bf16.msra.mxu0 0
  %239 = vmatprep.subr.bf16.mxu0 0
  %240 = vmatpush1.bf16.msra.mxu0 0
  %241 = vmatprep.subr.bf16.mxu0 0
  %242 = vmatpush1.bf16.msra.mxu0 0
  %243 = vmatprep.subr.bf16.mxu0 0
  %244 = vmatpush1.bf16.msra.mxu0 0
  %245 = vmatprep.subr.bf16.mxu0 0
  %246 = vmatpush1.bf16.msra.mxu0 0
  %247 = vmatprep.mubr.bf16.mxu0 0
  %248 = vmatmul.mubr.bf16.gmra.mrb[0].mxu0 %v143
  %v249 = vpop.f32.mrb[0].mxu0
  %v250 = vadd.f32 %v165, %v249
  %v251 = vpop.f32.mrb[0].mxu0
  %v252 = vpop.f32.mrb[0].mxu0
  %v253 = vadd.f32 %v165, %v252
  %v254 = vpop.f32.mrb[0].mxu0
  %255 = vdwg.mxu0
  %vm256 = vcmask 113664
  %257 = vst.msk [vmem:[%s5] sm:$0xff] %vm256, %v250
  %258 = vst.msk [vmem:[%s5 + $0x8] sm:$0xff] %vm256, %v253
  // Predicated region
  $region22: #{nnet_forward.1} parent=0 // pred_check
    _
  $region23: #{nnet_forward.1} parent=0 // pred_check_branch
    %260 = sbr.rel (0) target = $region25
  $region24: #{nnet_forward.1} parent=0 // pred_region
    _
  $region25: #{nnet_forward.1} parent=0 // pred_fallthru
    _
  // Predicated region
  $region26: #{nnet_forward.1} parent=0 // pred_check
    _
  $region27: #{nnet_forward.1} parent=0 // pred_check_branch
    %262 = sbr.rel (0) target = $region29
  $region28: #{nnet_forward.1} parent=0 // pred_region
    _
  $region29: #{nnet_forward.1} parent=0 // pred_fallthru
    _

</llo_original>
